<compile_context>
chip_gen: v6e
topology: v6e:2x2x1
jax: 0.10.0
libtpu: 0.0.40
codegen_flags: <defaults>
</compile_context>

<pallas_src>
import jax
import jax.numpy as jnp
from jax.experimental import pallas as pl
from jax.experimental.pallas import tpu as pltpu


def _token_embed_kernel(x_ref, pos_ref, o_ref):
    """One batch tile of `concat([cls, x], 1) + pos` in a lane-dense layout.

    x_ref:   (Bt, N*D)       patch tokens, flattened per batch row
    pos_ref: (1, (N+1)*D)    pos_embed with cls_token folded into lanes [0, D)
    o_ref:   (Bt, (N+1)*D)   output rows; (N+1)*D is a multiple of 128
    """
    bt = o_ref.shape[0]
    d = o_ref.shape[1] - x_ref.shape[1]  # embed_dim == width of the cls slot

    x = x_ref[...]
    # Zero-pad the cls slot in front of x (a 64-lane shift handled by the
    # otherwise-idle XLU), then one fused add + single full-block aligned
    # store.  The zero slot picks up the cls-folded pos row automatically.
    x_padded = jnp.concatenate([jnp.zeros((bt, d), dtype=x.dtype), x], axis=-1)
    o_ref[...] = (x_padded + pos_ref[...]).astype(o_ref.dtype)


def _round_up(n: int, m: int) -> int:
    return (n + m - 1) // m * m


def token_embedding(x, cls_token, pos_embed, *, batch_block=None, out_dtype=None,
                    vmem_limit_bytes=40 * 1024 * 1024):
    """x: (B, N, D), cls_token: (1, 1, D), pos_embed: (1, N+1, D) -> (B, N+1, D)."""
    B, N, D = x.shape
    assert cls_token.shape == (1, 1, D), cls_token.shape
    assert pos_embed.shape == (1, N + 1, D), pos_embed.shape

    if out_dtype is None:
        # Match PyTorch type promotion (f32 params + f32 input -> f32).
        # Pass out_dtype=jnp.bfloat16 when downstream accepts bf16: halves the
        # HBM write traffic of this streaming kernel.
        out_dtype = jnp.result_type(x.dtype, cls_token.dtype, pos_embed.dtype)

    # Fold cls_token into row 0 of pos_embed (tiny (1, N+1, D) XLA op) so the
    # kernel's zero-padded token-0 slot picks it up through the positional add:
    #   out[:, 0, :]  = cls_token + pos_embed[:, 0, :]
    #   out[:, 1:, :] = x + pos_embed[:, 1:, :]
    pos_dtype = jnp.result_type(cls_token.dtype, pos_embed.dtype)
    pos_folded = (
        pos_embed.astype(pos_dtype)
        .at[:, 0, :]
        .add(cls_token[:, 0, :].astype(pos_dtype))
    )

    # ---- lane-dense flattened views (free reshapes of contiguous HBM) ------
    in_cols = N * D             # 3136 for the default module
    out_cols = (N + 1) * D      # 3200 = 25 * 128 for the default module
    x_flat = x.reshape(B, in_cols)
    pos_flat = pos_folded.reshape(1, out_cols)

    # ---- batch tiling with padded-byte VMEM accounting ---------------------
    in_row_bytes = _round_up(in_cols, 128) * x.dtype.itemsize
    out_row_bytes = _round_up(out_cols, 128) * jnp.dtype(out_dtype).itemsize
    pos_bytes = 2 * _round_up(out_cols, 128) * pos_folded.dtype.itemsize
    per_row_bytes = 2 * (in_row_bytes + out_row_bytes)   # double-buffered x + out
    budget = vmem_limit_bytes - pos_bytes - (2 << 20)    # ~2 MiB slack
    max_rows = max(1, budget // per_row_bytes)

    if batch_block is None:
        target_out_bytes = 6 << 20   # ~6 MiB of output per grid step
        batch_block = max(1, target_out_bytes // out_row_bytes)
    batch_block = int(min(batch_block, max_rows, B))
    if batch_block < B:
        # (8, 128) rule: a partial second-minor block dim must be a multiple of 8.
        batch_block = min(B, max(8, batch_block // 8 * 8))
    num_steps = int(pl.cdiv(B, batch_block))
    if num_steps > 1 and num_steps % 2 == 1 and batch_block < B:
        # v7x megacore: an even number of (parallel) grid steps avoids a 2:1
        # imbalance between the two TensorCores.
        bb_even = _round_up(int(pl.cdiv(B, num_steps + 1)), 8)
        if 0 < bb_even <= min(max_rows, B):
            batch_block = bb_even
            num_steps = int(pl.cdiv(B, batch_block))

    out_flat = pl.pallas_call(
        _token_embed_kernel,
        out_shape=jax.ShapeDtypeStruct((B, out_cols), out_dtype),
        grid_spec=pltpu.PrefetchScalarGridSpec(
            num_scalar_prefetch=0,
            grid=(num_steps,),
            in_specs=[
                # x: one large lane-dense batch tile per grid step.
                pl.BlockSpec((batch_block, in_cols), lambda i: (i, 0)),
                # folded pos_embed: constant block index -> fetched once and
                # kept resident in VMEM across all grid steps (no re-DMA).
                pl.BlockSpec((1, out_cols), lambda i: (0, 0)),
            ],
            out_specs=pl.BlockSpec((batch_block, out_cols), lambda i: (i, 0)),
        ),
        compiler_params=pltpu.CompilerParams(
            # "parallel" lets v7x's 2 TensorCores split the batch tiles;
            # neutral on v5e/v6e (1 TC).
            dimension_semantics=("parallel",),
            # Load-bearing on v5e (16 MiB default scoped VMEM); safe headroom
            # on v7x (64 MiB physical).  The batch_block heuristic above keeps
            # the double-buffered working set well inside this limit.
            vmem_limit_bytes=vmem_limit_bytes,
        ),
    )(x_flat, pos_flat)

    return out_flat.reshape(B, N + 1, D)


def token_embedding_ref(x, cls_token, pos_embed):
    B = x.shape[0]
    cls_tokens = jnp.broadcast_to(cls_token, (B,) + cls_token.shape[1:])
    tokens = jnp.concatenate([cls_tokens, x], axis=1)
    return tokens + pos_embed


if __name__ == "__main__":
    # Module defaults: num_patches=49, embed_dim=64.
    batch = 2
    num_patches = 49
    embed_dim = 64

    key = jax.random.PRNGKey(0)
    k_x, k_cls, k_pos, k_x2 = jax.random.split(key, 4)

    x = jax.random.normal(k_x, (batch, num_patches, embed_dim), dtype=jnp.float32)
    cls_token = jax.random.normal(k_cls, (1, 1, embed_dim), dtype=jnp.float32)
    pos_embed = jax.random.normal(
        k_pos, (1, num_patches + 1, embed_dim), dtype=jnp.float32
    )

    out = jax.block_until_ready(token_embedding(x, cls_token, pos_embed))
    ref = token_embedding_ref(x, cls_token, pos_embed)

    assert out.shape == (batch, num_patches + 1, embed_dim), out.shape
    assert out.dtype == ref.dtype, (out.dtype, ref.dtype)
    assert jnp.allclose(out, ref, atol=1e-6, rtol=1e-6), "mismatch vs reference (B=2)"

    # Multi-step grid with a partial last batch block (B % batch_block != 0):
    # exercises boundary masking and the "parallel" batch axis.
    x2 = jax.random.normal(k_x2, (10, num_patches, embed_dim), dtype=jnp.float32)
    out2 = jax.block_until_ready(
        token_embedding(x2, cls_token, pos_embed, batch_block=8)
    )
    ref2 = token_embedding_ref(x2, cls_token, pos_embed)
    assert jnp.allclose(out2, ref2, atol=1e-6, rtol=1e-6), "mismatch vs reference (B=10)"

    print("KERNEL_OK")
</pallas_src>

<mosaic_0001>
module attributes {stable_mosaic.version = 11 : i64} {
  func.func @_token_embed_kernel(%arg0: i32, %arg1: memref<2x3136xf32, #tpu.memory_space<vmem>>, %arg2: memref<1x3200xf32, #tpu.memory_space<vmem>>, %arg3: memref<2x3200xf32, #tpu.memory_space<vmem>>) attributes {dimension_semantics = [#tpu.dimension_semantics<parallel>], iteration_bounds = array<i64: 1>, scalar_prefetch = 0 : i64, scratch_operands = 0 : i64, tpu.core_type = #tpu.core_type<tc>, window_params = [{transform_indices = @transform_0, window_bounds = array<i64: 2, 3136>}, {pipeline_mode = #tpu.pipeline_mode<synchronous>, transform_indices = @transform_1, window_bounds = array<i64: 1, 3200>}, {transform_indices = @transform_2, window_bounds = array<i64: 2, 3200>}]} {
    %c0 = arith.constant 0 : index
    %c0_0 = arith.constant 0 : index
    %0 = vector.load %arg1[%c0, %c0_0] : memref<2x3136xf32, #tpu.memory_space<vmem>>, vector<2x3136xf32>
    %cst = arith.constant 0.000000e+00 : f32
    %1 = vector.broadcast %cst : f32 to vector<2x64xf32>
    %2 = tpu.concatenate %1, %0 in 1 : vector<2x64xf32>, vector<2x3136xf32> -> vector<2x3200xf32>
    %c0_1 = arith.constant 0 : index
    %c0_2 = arith.constant 0 : index
    %3 = vector.load %arg2[%c0_1, %c0_2] : memref<1x3200xf32, #tpu.memory_space<vmem>>, vector<1x3200xf32>
    %4 = vector.broadcast %3 : vector<1x3200xf32> to vector<2x3200xf32>
    %5 = arith.addf %2, %4 : vector<2x3200xf32>
    %c0_3 = arith.constant 0 : index
    %c0_4 = arith.constant 0 : index
    %6 = vector.load %arg3[%c0_3, %c0_4] : memref<2x3200xf32, #tpu.memory_space<vmem>>, vector<2x3200xf32>
    tpu.vector_store %arg3[%c0_3, %c0_4], %5 {strides = array<i32>} : memref<2x3200xf32, #tpu.memory_space<vmem>>, vector<2x3200xf32>,
    return
  }
  func.func @transform_0(%arg0: i32) -> (i32, i32) {
    %c0_i32 = arith.constant 0 : i32
    %c0_i32_0 = arith.constant 0 : i32
    return %arg0, %c0_i32 : i32, i32
  }
  func.func @transform_1(%arg0: i32) -> (i32, i32) {
    %c0_i32 = arith.constant 0 : i32
    %c0_i32_0 = arith.constant 0 : i32
    %c0_i32_1 = arith.constant 0 : i32
    return %c0_i32, %c0_i32_0 : i32, i32
  }
  func.func @transform_2(%arg0: i32) -> (i32, i32) {
    %c0_i32 = arith.constant 0 : i32
    %c0_i32_0 = arith.constant 0 : i32
    return %arg0, %c0_i32 : i32, i32
  }
}

</mosaic_0001>

<llo_original>
// kernel: tpu_custom_call.1
$region0: #{tpu_custom_call.1}
  #allocation0 [shape = 'u32[]', space=smem, size = 0x4, offset = 0x4, fixed_abs, tag = 'smem constant byte address 0x4 - core index']
  #allocation1 [shape = 'u32[144,128]{1,0:T(1,128)}', space=vmem, size = 0x12000, scoped, tag = 'internal scratch']
  %s0 = inlined_call_operand.hbm [shape: f32[2,3136], index: 0, kind: input, shape index: {}]
  %s1 = inlined_call_operand.hbm [shape: f32[1,3200], index: 1, kind: input, shape index: {}]
  %s2 = inlined_call_operand.hbm [shape: f32[2,3200], index: 2, kind: output, shape index: {}]
  %s3 = sld [smem:[#allocation0]]
  $region26: #{tpu_custom_call.1} parent=0
    _
  %s5 = ssub.s32 1, %s3
  %s6 = scalar_select 0, %s5, %s3
  $region1: #{tpu_custom_call.1} parent=0
    #allocation2 [shape = 'u8[25600]{0}', space=vmem, size = 0x6400, scoped, tag = 'input window, operand 0, single buffered']
    #allocation3 [shape = 's32[1]{0}', space=sflag, size = 0x4, scoped, tag = 'scoped memory for tpu_custom_call.1']
    #allocation4 [shape = 's32[1]{0}', space=sflag, size = 0x4, scoped, tag = 'scoped memory for tpu_custom_call.1']
    #allocation5 [shape = 'u8[12800]{0}', space=vmem, size = 0x3400, scoped, tag = 'input window, operand 1, single buffered']
    #allocation6 [shape = 's32[1]{0}', space=sflag, size = 0x4, scoped, tag = 'scoped memory for tpu_custom_call.1']
    #allocation7 [shape = 'u8[25600]{0}', space=vmem, size = 0x6400, scoped, tag = 'output window, operand 0, single buffered']
    %7 = vsyncpa [#allocation3], 0
    %8 = vsyncpa [#allocation6], 0
    %9 = vsyncpa [#allocation4], 0
    // Predicated region
    $region2: #{tpu_custom_call.1} parent=1 // pred_check
      _
    $region3: #{tpu_custom_call.1} parent=1 // pred_check_branch
      %11 = sbr.rel (0) target = $region5
    $region4: #{tpu_custom_call.1} parent=1 // pred_region
      %s13 = ssub.s32 800, 800
      %14 = vsyncadd [#allocation3], %s13
      %s16 = sshll.u32 [#allocation2], 4
      %s17 = int_to_ptr.vmem [resolvable:$true] %s16
      %19 = dma.hbm_to_vmem [thread:$0]  %s0, 800, %s17, [#allocation3]
    $region5: #{tpu_custom_call.1} parent=1 // pred_fallthru
      _
    // Predicated region
    $region6: #{tpu_custom_call.1} parent=1 // pred_check
      _
    $region7: #{tpu_custom_call.1} parent=1 // pred_check_branch
      %21 = sbr.rel (0) target = $region9
    $region8: #{tpu_custom_call.1} parent=1 // pred_region
      %s23 = ssub.s32 400, 400
      %24 = vsyncadd [#allocation6], %s23
      %s26 = sshll.u32 [#allocation5], 4
      %s27 = int_to_ptr.vmem [resolvable:$true] %s26
      %29 = dma.hbm_to_vmem [thread:$0]  %s1, 400, %s27, [#allocation6]
    $region9: #{tpu_custom_call.1} parent=1 // pred_fallthru
      _
    // Predicated region
    $region10: #{tpu_custom_call.1} parent=1 // pred_check
      _
    $region11: #{tpu_custom_call.1} parent=1 // pred_check_branch
      %31 = sbr.rel (0) target = $region13
    $region12: #{tpu_custom_call.1} parent=1 // pred_region
      %32 = dma.done [#allocation3], 800
    $region13: #{tpu_custom_call.1} parent=1 // pred_fallthru
      _
    // Predicated region
    $region14: #{tpu_custom_call.1} parent=1 // pred_check
      _
    $region15: #{tpu_custom_call.1} parent=1 // pred_check_branch
      %34 = sbr.rel (0) target = $region17
    $region16: #{tpu_custom_call.1} parent=1 // pred_region
      %35 = dma.done [#allocation6], 400
    $region17: #{tpu_custom_call.1} parent=1 // pred_fallthru
      _
    %v36 = vld [vmem:[#allocation2] sm:$0xff]
    %v37 = vld [vmem:[#allocation2 + $0x8] sm:$0xff]
    %v38 = vld [vmem:[#allocation2 + $0x10] sm:$0xff]
    %v39 = vld [vmem:[#allocation2 + $0x18] sm:$0xff]
    %v40 = vld [vmem:[#allocation2 + $0x20] sm:$0xff]
    %v41 = vld [vmem:[#allocation2 + $0x28] sm:$0xff]
    %v42 = vld [vmem:[#allocation2 + $0x30] sm:$0x3]
    %v50 = vcombine.high %v36, %v36
    %v52 = vunpack.c.l.s4 1983009808
    %v53 = vunpack.c.0.s8 %v52
    %v54 = vlaneseq
    %v55 = vshrl.u32 %v54, 7
    %v56 = vsub.s32 %v53, %v55
    %v57 = vrot.slane %v36, %v56
    %v59 = vunpack.c.l.s4 1983009808
    %v60 = vunpack.c.0.s8 %v59
    %v61 = vlaneseq
    %v62 = vshrl.u32 %v61, 7
    %v63 = vsub.s32 %v60, %v62
    %v64 = vrot.slane %v50, %v63
    %v65 = vcombine.high %v57, %v57
    %v66 = vcombine.high %v64, %v64
    %v67 = vcombine.high %v37, %v37
    %v69 = vunpack.c.l.s4 1983009808
    %v70 = vunpack.c.0.s8 %v69
    %v71 = vlaneseq
    %v72 = vshrl.u32 %v71, 7
    %v73 = vsub.s32 %v70, %v72
    %v74 = vrot.slane %v37, %v73
    %v76 = vunpack.c.l.s4 1983009808
    %v77 = vunpack.c.0.s8 %v76
    %v78 = vlaneseq
    %v79 = vshrl.u32 %v78, 7
    %v80 = vsub.s32 %v77, %v79
    %v81 = vrot.slane %v67, %v80
    %v82 = vcombine.high %v74, %v74
    %v83 = vcombine.high %v81, %v81
    %v84 = vcombine.high %v38, %v38
    %v86 = vunpack.c.l.s4 1983009808
    %v87 = vunpack.c.0.s8 %v86
    %v88 = vlaneseq
    %v89 = vshrl.u32 %v88, 7
    %v90 = vsub.s32 %v87, %v89
    %v91 = vrot.slane %v38, %v90
    %v93 = vunpack.c.l.s4 1983009808
    %v94 = vunpack.c.0.s8 %v93
    %v95 = vlaneseq
    %v96 = vshrl.u32 %v95, 7
    %v97 = vsub.s32 %v94, %v96
    %v98 = vrot.slane %v84, %v97
    %v99 = vcombine.high %v91, %v91
    %v100 = vcombine.high %v98, %v98
    %v101 = vcombine.high %v39, %v39
    %v103 = vunpack.c.l.s4 1983009808
    %v104 = vunpack.c.0.s8 %v103
    %v105 = vlaneseq
    %v106 = vshrl.u32 %v105, 7
    %v107 = vsub.s32 %v104, %v106
    %v108 = vrot.slane %v39, %v107
    %v110 = vunpack.c.l.s4 1983009808
    %v111 = vunpack.c.0.s8 %v110
    %v112 = vlaneseq
    %v113 = vshrl.u32 %v112, 7
    %v114 = vsub.s32 %v111, %v113
    %v115 = vrot.slane %v101, %v114
    %v116 = vcombine.high %v108, %v108
    %v117 = vcombine.high %v115, %v115
    %v118 = vcombine.high %v40, %v40
    %v120 = vunpack.c.l.s4 1983009808
    %v121 = vunpack.c.0.s8 %v120
    %v122 = vlaneseq
    %v123 = vshrl.u32 %v122, 7
    %v124 = vsub.s32 %v121, %v123
    %v125 = vrot.slane %v40, %v124
    %v127 = vunpack.c.l.s4 1983009808
    %v128 = vunpack.c.0.s8 %v127
    %v129 = vlaneseq
    %v130 = vshrl.u32 %v129, 7
    %v131 = vsub.s32 %v128, %v130
    %v132 = vrot.slane %v118, %v131
    %v133 = vcombine.high %v125, %v125
    %v134 = vcombine.high %v132, %v132
    %v135 = vcombine.high %v41, %v41
    %v137 = vunpack.c.l.s4 1983009808
    %v138 = vunpack.c.0.s8 %v137
    %v139 = vlaneseq
    %v140 = vshrl.u32 %v139, 7
    %v141 = vsub.s32 %v138, %v140
    %v142 = vrot.slane %v41, %v141
    %v144 = vunpack.c.l.s4 1983009808
    %v145 = vunpack.c.0.s8 %v144
    %v146 = vlaneseq
    %v147 = vshrl.u32 %v146, 7
    %v148 = vsub.s32 %v145, %v147
    %v149 = vrot.slane %v135, %v148
    %v150 = vcombine.high %v142, %v142
    %v151 = vcombine.high %v149, %v149
    %v153 = vunpack.c.l.s4 1983009808
    %v154 = vunpack.c.0.s8 %v153
    %v155 = vlaneseq
    %v156 = vshrl.u32 %v155, 7
    %v157 = vsub.s32 %v154, %v156
    %v158 = vrot.slane %v42, %v157
    %159 = vrot.lane.b32.xlu0 %v57, 64
    %v160 = vpop.permute.xlu0 %159
    %161 = vrot.lane.b32.xlu0 %v65, 64
    %v162 = vpop.permute.xlu0 %161
    %163 = vrot.lane.b32.xlu0 %v64, 64
    %v164 = vpop.permute.xlu0 %163
    %165 = vrot.lane.b32.xlu0 %v66, 64
    %v166 = vpop.permute.xlu0 %165
    %167 = vrot.lane.b32.xlu0 %v74, 64
    %v168 = vpop.permute.xlu0 %167
    %169 = vrot.lane.b32.xlu0 %v82, 64
    %v170 = vpop.permute.xlu0 %169
    %171 = vrot.lane.b32.xlu0 %v81, 64
    %v172 = vpop.permute.xlu0 %171
    %173 = vrot.lane.b32.xlu0 %v83, 64
    %v174 = vpop.permute.xlu0 %173
    %175 = vrot.lane.b32.xlu0 %v91, 64
    %v176 = vpop.permute.xlu0 %175
    %177 = vrot.lane.b32.xlu0 %v99, 64
    %v178 = vpop.permute.xlu0 %177
    %179 = vrot.lane.b32.xlu0 %v98, 64
    %v180 = vpop.permute.xlu0 %179
    %181 = vrot.lane.b32.xlu0 %v100, 64
    %v182 = vpop.permute.xlu0 %181
    %183 = vrot.lane.b32.xlu0 %v108, 64
    %v184 = vpop.permute.xlu0 %183
    %185 = vrot.lane.b32.xlu0 %v116, 64
    %v186 = vpop.permute.xlu0 %185
    %187 = vrot.lane.b32.xlu0 %v115, 64
    %v188 = vpop.permute.xlu0 %187
    %189 = vrot.lane.b32.xlu0 %v117, 64
    %v190 = vpop.permute.xlu0 %189
    %191 = vrot.lane.b32.xlu0 %v125, 64
    %v192 = vpop.permute.xlu0 %191
    %193 = vrot.lane.b32.xlu0 %v133, 64
    %v194 = vpop.permute.xlu0 %193
    %195 = vrot.lane.b32.xlu0 %v132, 64
    %v196 = vpop.permute.xlu0 %195
    %197 = vrot.lane.b32.xlu0 %v134, 64
    %v198 = vpop.permute.xlu0 %197
    %199 = vrot.lane.b32.xlu0 %v142, 64
    %v200 = vpop.permute.xlu0 %199
    %201 = vrot.lane.b32.xlu0 %v150, 64
    %v202 = vpop.permute.xlu0 %201
    %203 = vrot.lane.b32.xlu0 %v149, 64
    %v204 = vpop.permute.xlu0 %203
    %205 = vrot.lane.b32.xlu0 %v151, 64
    %v206 = vpop.permute.xlu0 %205
    %207 = vrot.lane.b32.xlu0 %v158, 64
    %v208 = vpop.permute.xlu0 %207
    %vm209 = vcmask 523264
    %v210 = vsel %vm209, %v160, %v162
    %v211 = vsel %vm209, %v162, %v164
    %v212 = vsel %vm209, %v164, %v166
    %v213 = vsel %vm209, %v166, %v168
    %v214 = vsel %vm209, %v168, %v170
    %v215 = vsel %vm209, %v170, %v172
    %v216 = vsel %vm209, %v172, %v174
    %v217 = vsel %vm209, %v174, %v176
    %v218 = vsel %vm209, %v176, %v178
    %v219 = vsel %vm209, %v178, %v180
    %v220 = vsel %vm209, %v180, %v182
    %v221 = vsel %vm209, %v182, %v184
    %v222 = vsel %vm209, %v184, %v186
    %v223 = vsel %vm209, %v186, %v188
    %v224 = vsel %vm209, %v188, %v190
    %v225 = vsel %vm209, %v190, %v192
    %v226 = vsel %vm209, %v192, %v194
    %v227 = vsel %vm209, %v194, %v196
    %v228 = vsel %vm209, %v196, %v198
    %v229 = vsel %vm209, %v198, %v200
    %v230 = vsel %vm209, %v200, %v202
    %v231 = vsel %vm209, %v202, %v204
    %v232 = vsel %vm209, %v204, %v206
    %v233 = vsel %vm209, %v206, %v208
    %v259 = vsel %vm209, 0.0, %v160
    %v260 = vld [vmem:[#allocation5] sm:$0xff]
    %v261 = vld [vmem:[#allocation5 + $0x8] sm:$0xff]
    %v262 = vld [vmem:[#allocation5 + $0x10] sm:$0xff]
    %v263 = vld [vmem:[#allocation5 + $0x18] sm:$0x1]
    %v268 = vlaneseq
    %v269 = vshrl.u32 %v268, 7
    %v270 = vsub.s32 0, %v269
    %v271 = vrot.slane %v260, %v270
    %v272 = vlaneseq
    %v273 = vshrl.u32 %v272, 7
    %v274 = vsub.s32 1, %v273
    %v275 = vrot.slane %v260, %v274
    %v276 = vlaneseq
    %v277 = vshrl.u32 %v276, 7
    %v278 = vsub.s32 2, %v277
    %v279 = vrot.slane %v260, %v278
    %v280 = vlaneseq
    %v281 = vshrl.u32 %v280, 7
    %v282 = vsub.s32 3, %v281
    %v283 = vrot.slane %v260, %v282
    %v284 = vlaneseq
    %v285 = vshrl.u32 %v284, 7
    %v286 = vsub.s32 4, %v285
    %v287 = vrot.slane %v260, %v286
    %v288 = vlaneseq
    %v289 = vshrl.u32 %v288, 7
    %v290 = vsub.s32 5, %v289
    %v291 = vrot.slane %v260, %v290
    %v292 = vlaneseq
    %v293 = vshrl.u32 %v292, 7
    %v294 = vsub.s32 6, %v293
    %v295 = vrot.slane %v260, %v294
    %v296 = vlaneseq
    %v297 = vshrl.u32 %v296, 7
    %v298 = vsub.s32 7, %v297
    %v299 = vrot.slane %v260, %v298
    %v300 = vlaneseq
    %v301 = vshrl.u32 %v300, 7
    %v302 = vsub.s32 0, %v301
    %v303 = vrot.slane %v261, %v302
    %v304 = vlaneseq
    %v305 = vshrl.u32 %v304, 7
    %v306 = vsub.s32 1, %v305
    %v307 = vrot.slane %v261, %v306
    %v308 = vlaneseq
    %v309 = vshrl.u32 %v308, 7
    %v310 = vsub.s32 2, %v309
    %v311 = vrot.slane %v261, %v310
    %v312 = vlaneseq
    %v313 = vshrl.u32 %v312, 7
    %v314 = vsub.s32 3, %v313
    %v315 = vrot.slane %v261, %v314
    %v316 = vlaneseq
    %v317 = vshrl.u32 %v316, 7
    %v318 = vsub.s32 4, %v317
    %v319 = vrot.slane %v261, %v318
    %v320 = vlaneseq
    %v321 = vshrl.u32 %v320, 7
    %v322 = vsub.s32 5, %v321
    %v323 = vrot.slane %v261, %v322
    %v324 = vlaneseq
    %v325 = vshrl.u32 %v324, 7
    %v326 = vsub.s32 6, %v325
    %v327 = vrot.slane %v261, %v326
    %v328 = vlaneseq
    %v329 = vshrl.u32 %v328, 7
    %v330 = vsub.s32 7, %v329
    %v331 = vrot.slane %v261, %v330
    %v332 = vlaneseq
    %v333 = vshrl.u32 %v332, 7
    %v334 = vsub.s32 0, %v333
    %v335 = vrot.slane %v262, %v334
    %v336 = vlaneseq
    %v337 = vshrl.u32 %v336, 7
    %v338 = vsub.s32 1, %v337
    %v339 = vrot.slane %v262, %v338
    %v340 = vlaneseq
    %v341 = vshrl.u32 %v340, 7
    %v342 = vsub.s32 2, %v341
    %v343 = vrot.slane %v262, %v342
    %v344 = vlaneseq
    %v345 = vshrl.u32 %v344, 7
    %v346 = vsub.s32 3, %v345
    %v347 = vrot.slane %v262, %v346
    %v348 = vlaneseq
    %v349 = vshrl.u32 %v348, 7
    %v350 = vsub.s32 4, %v349
    %v351 = vrot.slane %v262, %v350
    %v352 = vlaneseq
    %v353 = vshrl.u32 %v352, 7
    %v354 = vsub.s32 5, %v353
    %v355 = vrot.slane %v262, %v354
    %v356 = vlaneseq
    %v357 = vshrl.u32 %v356, 7
    %v358 = vsub.s32 6, %v357
    %v359 = vrot.slane %v262, %v358
    %v360 = vlaneseq
    %v361 = vshrl.u32 %v360, 7
    %v362 = vsub.s32 7, %v361
    %v363 = vrot.slane %v262, %v362
    %v364 = vlaneseq
    %v365 = vshrl.u32 %v364, 7
    %v366 = vsub.s32 0, %v365
    %v367 = vrot.slane %v263, %v366
    %v393 = vadd.f32 %v259, %v271
    %v394 = vadd.f32 %v210, %v275
    %v395 = vadd.f32 %v211, %v279
    %v396 = vadd.f32 %v212, %v283
    %v397 = vadd.f32 %v213, %v287
    %v398 = vadd.f32 %v214, %v291
    %v399 = vadd.f32 %v215, %v295
    %v400 = vadd.f32 %v216, %v299
    %v401 = vadd.f32 %v217, %v303
    %v402 = vadd.f32 %v218, %v307
    %v403 = vadd.f32 %v219, %v311
    %v404 = vadd.f32 %v220, %v315
    %v405 = vadd.f32 %v221, %v319
    %v406 = vadd.f32 %v222, %v323
    %v407 = vadd.f32 %v223, %v327
    %v408 = vadd.f32 %v224, %v331
    %v409 = vadd.f32 %v225, %v335
    %v410 = vadd.f32 %v226, %v339
    %v411 = vadd.f32 %v227, %v343
    %v412 = vadd.f32 %v228, %v347
    %v413 = vadd.f32 %v229, %v351
    %v414 = vadd.f32 %v230, %v355
    %v415 = vadd.f32 %v231, %v359
    %v416 = vadd.f32 %v232, %v363
    %v417 = vadd.f32 %v233, %v367
    %v443 = vcombine.low %v393, %v394
    %v444 = vcombine.low %v395, %v396
    %v446 = vunpack.c.l.s4 1983009808
    %v447 = vunpack.c.0.s8 %v446
    %v448 = vlaneseq
    %v449 = vshrl.u32 %v448, 7
    %v450 = vsub.s32 %v447, %v449
    %v451 = vrot.slane %v443, %v450
    %v453 = vunpack.c.l.s4 1983009808
    %v454 = vunpack.c.0.s8 %v453
    %v455 = vlaneseq
    %v456 = vshrl.u32 %v455, 7
    %v457 = vsub.s32 %v454, %v456
    %v458 = vrot.slane %v444, %v457
    %v459 = vcombine.low %v451, %v458
    %v460 = vcombine.low %v397, %v398
    %v461 = vcombine.low %v399, %v400
    %v463 = vunpack.c.l.s4 1983009808
    %v464 = vunpack.c.0.s8 %v463
    %v465 = vlaneseq
    %v466 = vshrl.u32 %v465, 7
    %v467 = vsub.s32 %v464, %v466
    %v468 = vrot.slane %v460, %v467
    %v470 = vunpack.c.l.s4 1983009808
    %v471 = vunpack.c.0.s8 %v470
    %v472 = vlaneseq
    %v473 = vshrl.u32 %v472, 7
    %v474 = vsub.s32 %v471, %v473
    %v475 = vrot.slane %v461, %v474
    %v476 = vcombine.low %v468, %v475
    %v477 = vcombine.low %v401, %v402
    %v478 = vcombine.low %v403, %v404
    %v480 = vunpack.c.l.s4 1983009808
    %v481 = vunpack.c.0.s8 %v480
    %v482 = vlaneseq
    %v483 = vshrl.u32 %v482, 7
    %v484 = vsub.s32 %v481, %v483
    %v485 = vrot.slane %v477, %v484
    %v487 = vunpack.c.l.s4 1983009808
    %v488 = vunpack.c.0.s8 %v487
    %v489 = vlaneseq
    %v490 = vshrl.u32 %v489, 7
    %v491 = vsub.s32 %v488, %v490
    %v492 = vrot.slane %v478, %v491
    %v493 = vcombine.low %v485, %v492
    %v494 = vcombine.low %v405, %v406
    %v495 = vcombine.low %v407, %v408
    %v497 = vunpack.c.l.s4 1983009808
    %v498 = vunpack.c.0.s8 %v497
    %v499 = vlaneseq
    %v500 = vshrl.u32 %v499, 7
    %v501 = vsub.s32 %v498, %v500
    %v502 = vrot.slane %v494, %v501
    %v504 = vunpack.c.l.s4 1983009808
    %v505 = vunpack.c.0.s8 %v504
    %v506 = vlaneseq
    %v507 = vshrl.u32 %v506, 7
    %v508 = vsub.s32 %v505, %v507
    %v509 = vrot.slane %v495, %v508
    %v510 = vcombine.low %v502, %v509
    %v511 = vcombine.low %v409, %v410
    %v512 = vcombine.low %v411, %v412
    %v514 = vunpack.c.l.s4 1983009808
    %v515 = vunpack.c.0.s8 %v514
    %v516 = vlaneseq
    %v517 = vshrl.u32 %v516, 7
    %v518 = vsub.s32 %v515, %v517
    %v519 = vrot.slane %v511, %v518
    %v521 = vunpack.c.l.s4 1983009808
    %v522 = vunpack.c.0.s8 %v521
    %v523 = vlaneseq
    %v524 = vshrl.u32 %v523, 7
    %v525 = vsub.s32 %v522, %v524
    %v526 = vrot.slane %v512, %v525
    %v527 = vcombine.low %v519, %v526
    %v528 = vcombine.low %v413, %v414
    %v529 = vcombine.low %v415, %v416
    %v531 = vunpack.c.l.s4 1983009808
    %v532 = vunpack.c.0.s8 %v531
    %v533 = vlaneseq
    %v534 = vshrl.u32 %v533, 7
    %v535 = vsub.s32 %v532, %v534
    %v536 = vrot.slane %v528, %v535
    %v538 = vunpack.c.l.s4 1983009808
    %v539 = vunpack.c.0.s8 %v538
    %v540 = vlaneseq
    %v541 = vshrl.u32 %v540, 7
    %v542 = vsub.s32 %v539, %v541
    %v543 = vrot.slane %v529, %v542
    %v544 = vcombine.low %v536, %v543
    %v546 = vunpack.c.l.s4 1983009808
    %v547 = vunpack.c.0.s8 %v546
    %v548 = vlaneseq
    %v549 = vshrl.u32 %v548, 7
    %v550 = vsub.s32 %v547, %v549
    %v551 = vrot.slane %v417, %v550
    %559 = vst [vmem:[#allocation7] sm:$0xff] %v459
    %560 = vst [vmem:[#allocation7 + $0x8] sm:$0xff] %v476
    %561 = vst [vmem:[#allocation7 + $0x10] sm:$0xff] %v493
    %562 = vst [vmem:[#allocation7 + $0x18] sm:$0xff] %v510
    %563 = vst [vmem:[#allocation7 + $0x20] sm:$0xff] %v527
    %564 = vst [vmem:[#allocation7 + $0x28] sm:$0xff] %v544
    %565 = vst [vmem:[#allocation7 + $0x30] sm:$0x3] %v551
    // Predicated region
    $region18: #{tpu_custom_call.1} parent=1 // pred_check
      _
    $region19: #{tpu_custom_call.1} parent=1 // pred_check_branch
      %567 = sbr.rel (0) target = $region21
    $region20: #{tpu_custom_call.1} parent=1 // pred_region
      %s569 = ssub.s32 800, 800
      %570 = vsyncadd [#allocation4], %s569
      %s572 = sshll.u32 [#allocation7], 4
      %s573 = int_to_ptr.vmem [resolvable:$true] %s572
      %575 = dma.vmem_to_hbm [thread:$0]  %s573, 800, %s2, [#allocation4]
    $region21: #{tpu_custom_call.1} parent=1 // pred_fallthru
      _
    // Predicated region
    $region22: #{tpu_custom_call.1} parent=1 // pred_check
      _
    $region23: #{tpu_custom_call.1} parent=1 // pred_check_branch
      %577 = sbr.rel (0) target = $region25
    $region24: #{tpu_custom_call.1} parent=1 // pred_region
      %578 = dma.done [#allocation4], 800
    $region25: #{tpu_custom_call.1} parent=1 // pred_fallthru
      _
    %579 = vsyncpa [#allocation3], 1
    %580 = vsyncpa [#allocation6], 1
    %581 = vsyncpa [#allocation4], 1

</llo_original>
